<compile_context>
chip_gen: v7x
topology: tpu7x:2x2x1
jax: 0.10.0
libtpu: 0.0.40
codegen_flags: <defaults>
</compile_context>

<pallas_src>
import numpy as np
import jax
import jax.numpy as jnp
from jax import lax
from jax.experimental import pallas as pl
from jax.experimental.pallas import tpu as pltpu

WIN_LEN = 400
WIN_INC = 100
FFT_LEN = 512
N_BINS = FFT_LEN // 2        # 256 kept bins (rfft bins 1..256; DC dropped by the module)
CH = 4                       # bottleneck / DenseBlock channels
DEPTH = 4                    # DenseBlock depth
LN_EPS = 1e-5                # nn.LayerNorm default eps
HALO = 16                    # causal history needed per time tile: sum(dil)=15, padded to 16
MAX_T_TILE = 256             # Kernel B time-tile rows (keeps VMEM ~10 MiB incl. v7x)
MAX_M_TILE = 512             # Kernel A frame-row tile


def _cdiv(a, b):
    return -(-a // b)


def _round_up(x, m):
    return _cdiv(x, m) * m


def _build_stft_matrix_np():
    """(512, 512) matrix: frame(400 samples, zero-padded to 512) @ K = [real|imag] of bins 1..256.

    Matches DCCRN ConvSTFT init_kernels: np.fft.rfft(np.eye(512))[:400] rows times a periodic
    hann(400) window ('hanning').  Bin 0 is omitted because the encoder drops it.
    """
    n = np.arange(WIN_LEN, dtype=np.float64)
    window = 0.5 - 0.5 * np.cos(2.0 * np.pi * n / WIN_LEN)          # periodic hann(400)
    bins = np.arange(1, N_BINS + 1, dtype=np.float64)
    ang = 2.0 * np.pi * np.outer(n, bins) / FFT_LEN                  # (400, 256)
    k = np.zeros((FFT_LEN, 2 * N_BINS), dtype=np.float64)
    k[:WIN_LEN, :N_BINS] = np.cos(ang) * window[:, None]             # real kernel
    k[:WIN_LEN, N_BINS:] = -np.sin(ang) * window[:, None]            # imag kernel
    return k.astype(np.float32)


_STFT_MATRIX_NP = _build_stft_matrix_np()


# ----------------------------- Kernel A: packed STFT matmul + |.| epilogue -----------------------------

def _stft_kernel(frames_ref, k_ref, spec_ref, mags_ref):
    # frames: (TILE_M, 512), k: (512, 512) -> spec: (TILE_M, 512) = [real | imag], mags: (TILE_M, 256)
    spec = jnp.dot(frames_ref[...], k_ref[...], preferred_element_type=jnp.float32)
    spec_ref[...] = spec
    re = spec[:, :N_BINS]
    im = spec[:, N_BINS:]
    mags_ref[...] = jnp.sqrt(re * re + im * im)      # EUP sqrt is free next to the MXU matmul


# -------------------- Kernel B: bottleneck + LayerNorm + PReLU + DenseBlock (time-tiled) --------------------

def _encoder_kernel(mags_ref, phase_ref, gam_ref, bet_ref,
                    bnw_ref, bnb_ref, alp_ref, wcat_ref, cbias_ref, out_ref):
    # mags/phase: (1, 1, TT+HALO, 256) VMEM windows; gam/bet: (5, 256) VMEM
    # bnw (8,), bnb (4,), alp (20,), wcat (960,), cbias (16,): f32 scalars in SMEM
    tw = mags_ref.shape[2]                 # tile rows incl. halo
    fdim = mags_ref.shape[3]
    tt = out_ref.shape[2]                  # valid (written) rows
    halo = tw - tt
    t0 = pl.program_id(1) * tt             # global frame index of this tile's first valid row

    mags = mags_ref[0, 0]
    phase = phase_ref[0, 0]
    gam = gam_ref[...]
    bet = bet_ref[...]

    # hoisted iotas / masks (JAX does not CSE broadcast/compare -> build once)
    row_ids = lax.broadcasted_iota(jnp.int32, (tw, fdim), 0)
    col_ids = lax.broadcasted_iota(jnp.int32, (tw, fdim), 1)
    left_edge = col_ids < 1                              # "f-1" tap is zero padding at f=0
    right_edge = col_ids >= fdim - 1                     # "f+1" tap is zero padding at f=255
    zero_head = jnp.maximum(halo - t0, 0)                # local rows mapping to global frames < 0

    def layer_norm(x, j):
        m = jnp.mean(x, axis=-1, keepdims=True)
        v = jnp.maximum(jnp.mean(x * x, axis=-1, keepdims=True) - m * m, 0.0)
        return (x - m) * lax.rsqrt(v + LN_EPS) * gam[j:j + 1, :] + bet[j:j + 1, :]

    def prelu(x, a):
        return jnp.where(x >= 0.0, x, a * x)

    def mix_freq(p0, p1, p2):
        # p_kf = channel-weighted sum for freq tap kf; shift once to align taps.
        y0 = jnp.where(left_edge, 0.0, pltpu.roll(p0, shift=1, axis=1))            # source f-1
        y2 = jnp.where(right_edge, 0.0, pltpu.roll(p2, shift=fdim - 1, axis=1))    # source f+1
        return y0 + p1 + y2

    def shift_time(x, dil):
        # causal tap: source row t - dil; zero where the source is the ConstantPad2d
        # region (global frame < 0) or where the roll wrapped (confined to the halo).
        mask = row_ids < (dil + zero_head)
        return jnp.where(mask, 0.0, pltpu.roll(x, shift=dil, axis=0))

    # ---- bottleneck Conv2d(2->4, 1x1) + LayerNorm(256) + PReLU(4) ----
    skip = []
    for c in range(CH):
        z = bnw_ref[2 * c] * mags + bnw_ref[2 * c + 1] * phase + bnb_ref[c]
        skip.append(prelu(layer_norm(z, 0), alp_ref[c]))

    # ---- DenseBlock: causal dilated Conv2d((2,3), dil=2**i) + LN + PReLU, dense skips ----
    out_planes = skip
    w_off = 0
    for li in range(DEPTH):
        dil = 2 ** li
        cin = CH * (li + 1)
        out_planes = []
        for co in range(CH):
            # 6 unshifted tap accumulators (kt, kf); conv bias folded into the (kt=1, kf=1) slot.
            parts = [jnp.zeros((tw, fdim), jnp.float32) for _ in range(6)]
            parts[4] = cbias_ref[li * CH + co] + parts[4]
            for ci in range(cin):
                x = skip[ci]
                base = w_off + (co * cin + ci) * 6
                for idx in range(6):                      # idx = kt*3 + kf
                    parts[idx] = parts[idx] + wcat_ref[base + idx] * x
            cur = mix_freq(parts[3], parts[4], parts[5])   # kt = 1 taps (current row)
            prev = mix_freq(parts[0], parts[1], parts[2])  # kt = 0 taps (row t - dil)
            z = cur + shift_time(prev, dil)
            out_planes.append(prelu(layer_norm(z, li + 1), alp_ref[(li + 1) * CH + co]))
        skip = out_planes + skip                           # torch.cat([out, skip], dim=1)
        w_off += CH * cin * 6

    for co in range(CH):
        out_ref[0, co, :, :] = out_planes[co][halo:, :]    # drop the halo rows


# ----------------------------------- wrapper -----------------------------------

def dctcn_encoder_forward(inputs, bn_w, bn_b, dense_ws, dense_bs,
                          ln_gamma, ln_beta, prelu_alpha):
    """DCTCN_Encoder.forward.  inputs: waveform (L,) or (B, L) -> (B, 1024, T)."""
    if inputs.ndim == 1:
        inputs = inputs[None, :]
    inputs = inputs.astype(jnp.float32)
    bsz, wav_len = inputs.shape

    # --- ConvSTFT framing: F.pad(300, 300) then stride-100 frames of 400 samples,
    # built from 4 overlapping hop slices (pure slicing, no gather/scatter).
    # TODO(synk): frames are 5.1x the waveform; for very long audio assemble them in-kernel
    # from the hop array to avoid the HBM round trip.
    pad = WIN_LEN - WIN_INC
    x = jnp.pad(inputs, ((0, 0), (pad, pad)))
    lp = wav_len + 2 * pad
    t_frames = (lp - WIN_LEN) // WIN_INC + 1
    need = (t_frames + 3) * WIN_INC
    if need > lp:
        x = jnp.pad(x, ((0, 0), (0, need - lp)))
    hops = x[:, :need].reshape(bsz, t_frames + 3, WIN_INC)
    frames = jnp.concatenate(
        [hops[:, 0:t_frames], hops[:, 1:t_frames + 1],
         hops[:, 2:t_frames + 2], hops[:, 3:t_frames + 3],
         jnp.zeros((bsz, t_frames, FFT_LEN - WIN_LEN), jnp.float32)],
        axis=-1)                                                     # (B, T, 512)

    # --- Kernel A: lane-aligned windowed-DFT matmul over B*T frame rows, big row tiles.
    m_rows = bsz * t_frames
    frames = frames.reshape(m_rows, FFT_LEN)
    n_mt = _cdiv(m_rows, MAX_M_TILE)
    tile_m = _round_up(_cdiv(m_rows, n_mt), 8)
    m_pad = n_mt * tile_m
    if m_pad > m_rows:
        frames = jnp.pad(frames, ((0, m_pad - m_rows), (0, 0)))
    stft_k = jnp.asarray(_STFT_MATRIX_NP)

    spec, mags = pl.pallas_call(
        _stft_kernel,
        out_shape=(jax.ShapeDtypeStruct((m_pad, FFT_LEN), jnp.float32),
                   jax.ShapeDtypeStruct((m_pad, N_BINS), jnp.float32)),
        grid_spec=pltpu.PrefetchScalarGridSpec(
            num_scalar_prefetch=0,
            grid=(n_mt,),
            in_specs=[
                pl.BlockSpec((tile_m, FFT_LEN), lambda i: (i, 0)),
                pl.BlockSpec((FFT_LEN, FFT_LEN), lambda i: (0, 0)),   # K stays resident
            ],
            out_specs=[
                pl.BlockSpec((tile_m, FFT_LEN), lambda i: (i, 0)),
                pl.BlockSpec((tile_m, N_BINS), lambda i: (i, 0)),
            ],
        ),
        compiler_params=pltpu.CompilerParams(dimension_semantics=("parallel",)),
    )(frames, stft_k)

    spec = spec[:m_rows].reshape(bsz, t_frames, FFT_LEN)
    mags = mags[:m_rows].reshape(bsz, t_frames, N_BINS)
    # TODO(synk): atan2 has no guaranteed Mosaic lowering; phase stays in XLA glue.
    phase = jnp.arctan2(spec[..., N_BINS:], spec[..., :N_BINS])

    # --- Kernel B: time-tiled fused bottleneck + LN + PReLU + DenseBlock.
    n_tt = _cdiv(t_frames, MAX_T_TILE)
    tt = _round_up(_cdiv(t_frames, n_tt), 8)
    t_pad = n_tt * tt

    def make_windows(a):
        # prepend the 16-row causal zero halo, pad the tail, slice overlapping tile windows.
        a = jnp.pad(a, ((0, 0), (HALO, t_pad - t_frames), (0, 0)))
        return jnp.stack([a[:, i * tt: i * tt + tt + HALO] for i in range(n_tt)], axis=1)

    mags_win = make_windows(mags)                                    # (B, n_tt, tt+HALO, 256)
    phase_win = make_windows(phase)

    bnw_flat = bn_w.reshape(-1).astype(jnp.float32)                  # (8,)  [c, k] row-major
    bnb_flat = bn_b.reshape(-1).astype(jnp.float32)                  # (4,)
    alp_flat = prelu_alpha.reshape(-1).astype(jnp.float32)           # (20,) [layer, c]
    wcat = jnp.concatenate([w.reshape(-1) for w in dense_ws]).astype(jnp.float32)   # (960,)
    cbias = jnp.concatenate([b.reshape(-1) for b in dense_bs]).astype(jnp.float32)  # (16,)

    dense = pl.pallas_call(
        _encoder_kernel,
        out_shape=jax.ShapeDtypeStruct((bsz, CH, t_pad, N_BINS), jnp.float32),
        grid_spec=pltpu.PrefetchScalarGridSpec(
            num_scalar_prefetch=0,
            grid=(bsz, n_tt),
            in_specs=[
                pl.BlockSpec((1, 1, tt + HALO, N_BINS), lambda b, i: (b, i, 0, 0)),
                pl.BlockSpec((1, 1, tt + HALO, N_BINS), lambda b, i: (b, i, 0, 0)),
                pl.BlockSpec((DEPTH + 1, N_BINS), lambda b, i: (0, 0)),
                pl.BlockSpec((DEPTH + 1, N_BINS), lambda b, i: (0, 0)),
                pl.BlockSpec(memory_space=pltpu.MemorySpace.SMEM),   # bottleneck conv w
                pl.BlockSpec(memory_space=pltpu.MemorySpace.SMEM),   # bottleneck conv b
                pl.BlockSpec(memory_space=pltpu.MemorySpace.SMEM),   # PReLU alphas
                pl.BlockSpec(memory_space=pltpu.MemorySpace.SMEM),   # dense conv weights
                pl.BlockSpec(memory_space=pltpu.MemorySpace.SMEM),   # dense conv biases
            ],
            out_specs=pl.BlockSpec((1, CH, tt, N_BINS), lambda b, i: (b, 0, i, 0)),
        ),
        compiler_params=pltpu.CompilerParams(
            dimension_semantics=("parallel", "parallel")),
    )(mags_win, phase_win,
      ln_gamma.astype(jnp.float32), ln_beta.astype(jnp.float32),
      bnw_flat, bnb_flat, alp_flat, wcat, cbias)

    out = dense[:, :, :t_frames, :]                                  # (B, 4, T, 256)
    # final permute(0,1,3,2) + view(B, 4*256, T) — layout plumbing kept in plain JAX.
    out = jnp.transpose(out, (0, 1, 3, 2)).reshape(bsz, CH * N_BINS, t_frames)
    return out


if __name__ == "__main__":
    B, L = 2, 1300                     # small waveform: T = (1300 + 200)//100 + 1 = 16 frames
    key = jax.random.PRNGKey(0)
    ks = jax.random.split(key, 12)

    wav = jax.random.normal(ks[0], (B, L), jnp.float32)

    # parameters (deterministic synthetic init, shapes as in the module):
    bn_w = jax.random.normal(ks[1], (CH, 2, 1, 1), jnp.float32) * 0.2      # Conv2d(2,4,(1,1)) weight
    bn_b = jax.random.normal(ks[2], (CH,), jnp.float32) * 0.05             # Conv2d bias
    dense_ws = [jax.random.normal(ks[3 + i], (CH, CH * (i + 1), 2, 3), jnp.float32) * 0.1
                for i in range(DEPTH)]                                      # DenseBlock conv weights
    dense_bs = [jax.random.normal(ks[7 + i], (CH,), jnp.float32) * 0.05
                for i in range(DEPTH)]                                      # DenseBlock conv biases
    ln_gamma = jnp.ones((DEPTH + 1, N_BINS), jnp.float32)                   # LayerNorm default init
    ln_beta = jnp.zeros((DEPTH + 1, N_BINS), jnp.float32)
    prelu_alpha = jnp.full((DEPTH + 1, CH), 0.25, jnp.float32)              # PReLU default init

    out = dctcn_encoder_forward(wav, bn_w, bn_b, dense_ws, dense_bs,
                                ln_gamma, ln_beta, prelu_alpha)
    jax.block_until_ready(out)

    T = (L + 2 * (WIN_LEN - WIN_INC) - WIN_LEN) // WIN_INC + 1
    assert out.shape == (B, CH * N_BINS, T)
    assert bool(jnp.all(jnp.isfinite(out)))
    print("KERNEL_OK")
</pallas_src>

<mosaic_0001>
module attributes {stable_mosaic.version = 11 : i64} {
  func.func @_stft_kernel(%arg0: i32, %arg1: memref<32x512xf32, #tpu.memory_space<vmem>>, %arg2: memref<512x512xf32, #tpu.memory_space<vmem>>, %arg3: memref<32x512xf32, #tpu.memory_space<vmem>>, %arg4: memref<32x256xf32, #tpu.memory_space<vmem>>) attributes {dimension_semantics = [#tpu.dimension_semantics<parallel>], iteration_bounds = array<i64: 1>, scalar_prefetch = 0 : i64, scratch_operands = 0 : i64, tpu.core_type = #tpu.core_type<tc>, window_params = [{transform_indices = @transform_0, window_bounds = array<i64: 32, 512>}, {pipeline_mode = #tpu.pipeline_mode<synchronous>, transform_indices = @transform_1, window_bounds = array<i64: 512, 512>}, {transform_indices = @transform_2, window_bounds = array<i64: 32, 512>}, {transform_indices = @transform_3, window_bounds = array<i64: 32, 256>}]} {
    %c0 = arith.constant 0 : index
    %c0_0 = arith.constant 0 : index
    %0 = vector.load %arg1[%c0, %c0_0] : memref<32x512xf32, #tpu.memory_space<vmem>>, vector<32x512xf32>
    %c0_1 = arith.constant 0 : index
    %c0_2 = arith.constant 0 : index
    %1 = vector.load %arg2[%c0_1, %c0_2] : memref<512x512xf32, #tpu.memory_space<vmem>>, vector<512x512xf32>
    %cst = arith.constant dense<0.000000e+00> : vector<32x512xf32>
    %2 = tpu.matmul %0, %1, %cst {dimension_numbers = #tpu.dot_dimension_numbers<[1], [0], [0], [1], [0, 0, 1, 1], [], []>} : vector<32x512xf32>, vector<512x512xf32>, vector<32x512xf32> -> vector<32x512xf32>
    %c0_3 = arith.constant 0 : index
    %c0_4 = arith.constant 0 : index
    %3 = vector.load %arg3[%c0_3, %c0_4] : memref<32x512xf32, #tpu.memory_space<vmem>>, vector<32x512xf32>
    tpu.vector_store %arg3[%c0_3, %c0_4], %2 {strides = array<i32>} : memref<32x512xf32, #tpu.memory_space<vmem>>, vector<32x512xf32>,
    %4 = vector.extract_strided_slice %2 {offsets = [0, 0], sizes = [32, 256], strides = [1, 1]} : vector<32x512xf32> to vector<32x256xf32>
    %5 = vector.extract_strided_slice %2 {offsets = [0, 256], sizes = [32, 256], strides = [1, 1]} : vector<32x512xf32> to vector<32x256xf32>
    %6 = arith.mulf %4, %4 : vector<32x256xf32>
    %7 = arith.mulf %5, %5 : vector<32x256xf32>
    %8 = arith.addf %6, %7 : vector<32x256xf32>
    %9 = math.sqrt %8 : vector<32x256xf32>
    %c0_5 = arith.constant 0 : index
    %c0_6 = arith.constant 0 : index
    %10 = vector.load %arg4[%c0_5, %c0_6] : memref<32x256xf32, #tpu.memory_space<vmem>>, vector<32x256xf32>
    tpu.vector_store %arg4[%c0_5, %c0_6], %9 {strides = array<i32>} : memref<32x256xf32, #tpu.memory_space<vmem>>, vector<32x256xf32>,
    return
  }
  func.func @transform_0(%arg0: i32) -> (i32, i32) {
    %c0_i32 = arith.constant 0 : i32
    %c0_i32_0 = arith.constant 0 : i32
    return %arg0, %c0_i32 : i32, i32
  }
  func.func @transform_1(%arg0: i32) -> (i32, i32) {
    %c0_i32 = arith.constant 0 : i32
    %c0_i32_0 = arith.constant 0 : i32
    %c0_i32_1 = arith.constant 0 : i32
    return %c0_i32, %c0_i32_0 : i32, i32
  }
  func.func @transform_2(%arg0: i32) -> (i32, i32) {
    %c0_i32 = arith.constant 0 : i32
    %c0_i32_0 = arith.constant 0 : i32
    return %arg0, %c0_i32 : i32, i32
  }
  func.func @transform_3(%arg0: i32) -> (i32, i32) {
    %c0_i32 = arith.constant 0 : i32
    %c0_i32_0 = arith.constant 0 : i32
    return %arg0, %c0_i32 : i32, i32
  }
}

</mosaic_0001>

<llo_original>
// kernel: tpu_custom_call.1
$region0: #{tpu_custom_call.1}
  #allocation0 [shape = 'u32[]', space=smem, size = 0x4, offset = 0x4, fixed_abs, tag = 'smem constant byte address 0x4 - core index']
  #allocation1 [shape = 'u32[144,128]{1,0:T(1,128)}', space=vmem, size = 0x12000, scoped, tag = 'internal scratch']
  %s0 = inlined_call_operand.hbm [shape: f32[32,512], index: 0, kind: input, shape index: {}]
  %s1 = inlined_call_operand.hbm [shape: f32[512,512], index: 1, kind: input, shape index: {}]
  %s2 = inlined_call_operand.hbm [shape: f32[32,512], index: 2, kind: output, shape index: {0}]
  %s3 = inlined_call_operand.hbm [shape: f32[32,256], index: 3, kind: output, shape index: {1}]
  %4 = xla_tuple %s2, %s3
  %s5 = sld [smem:[#allocation0]]
  $region34: #{tpu_custom_call.1} parent=0
    _
  %s7 = ssub.s32 1, %s5
  %s8 = scalar_select 0, %s7, %s5
  $region1: #{tpu_custom_call.1} parent=0
    #allocation2 [shape = 'u8[65536]{0}', space=vmem, size = 0x10000, scoped, tag = 'input window, operand 0, single buffered']
    #allocation3 [shape = 's32[1]{0}', space=sflag, size = 0x4, scoped, tag = 'scoped memory for tpu_custom_call.1']
    #allocation4 [shape = 's32[1]{0}', space=sflag, size = 0x4, scoped, tag = 'scoped memory for tpu_custom_call.1']
    #allocation5 [shape = 'u8[1048576]{0}', space=vmem, size = 0x100000, scoped, tag = 'input window, operand 1, single buffered']
    #allocation6 [shape = 's32[1]{0}', space=sflag, size = 0x4, scoped, tag = 'scoped memory for tpu_custom_call.1']
    #allocation7 [shape = 'u8[65536]{0}', space=vmem, size = 0x10000, scoped, tag = 'output window, operand 0, single buffered']
    #allocation8 [shape = 'u8[32768]{0}', space=vmem, size = 0x8000, scoped, tag = 'output window, operand 1, single buffered']
    #allocation9 [shape = 's32[1]{0}', space=sflag, size = 0x4, scoped, tag = 'scoped memory for tpu_custom_call.1']
    %9 = vsyncpa [#allocation3], 0
    %10 = vsyncpa [#allocation6], 0
    %11 = vsyncpa [#allocation4], 0
    %12 = vsyncpa [#allocation9], 0
    // Predicated region
    $region2: #{tpu_custom_call.1} parent=1 // pred_check
      _
    $region3: #{tpu_custom_call.1} parent=1 // pred_check_branch
      %14 = sbr.rel (0) target = $region5
    $region4: #{tpu_custom_call.1} parent=1 // pred_region
      %s16 = ssub.s32 2048, 2048
      %17 = vsyncadd [#allocation3], %s16
      %s18 = sshll.u32 [#allocation2], 4
      %s19 = int_to_ptr.vmem [resolvable:$true] %s18
      %24 = dma.hbm_to_vmem [thread:$0]  %s0, 2048, %s19, [#allocation3], 512, 512, 32
    $region5: #{tpu_custom_call.1} parent=1 // pred_fallthru
      _
    // Predicated region
    $region6: #{tpu_custom_call.1} parent=1 // pred_check
      _
    $region7: #{tpu_custom_call.1} parent=1 // pred_check_branch
      %26 = sbr.rel (0) target = $region9
    $region8: #{tpu_custom_call.1} parent=1 // pred_region
      %s28 = ssub.s32 32768, 32768
      %29 = vsyncadd [#allocation6], %s28
      %s30 = sshll.u32 [#allocation5], 4
      %s31 = int_to_ptr.vmem [resolvable:$true] %s30
      %36 = dma.hbm_to_vmem [thread:$0]  %s1, 32768, %s31, [#allocation6], 512, 512, 32
    $region9: #{tpu_custom_call.1} parent=1 // pred_fallthru
      _
    // Predicated region
    $region10: #{tpu_custom_call.1} parent=1 // pred_check
      _
    $region11: #{tpu_custom_call.1} parent=1 // pred_check_branch
      %38 = sbr.rel (0) target = $region13
    $region12: #{tpu_custom_call.1} parent=1 // pred_region
      %39 = dma.done [#allocation3], 2048
    $region13: #{tpu_custom_call.1} parent=1 // pred_fallthru
      _
    // Predicated region
    $region14: #{tpu_custom_call.1} parent=1 // pred_check
      _
    $region15: #{tpu_custom_call.1} parent=1 // pred_check_branch
      %41 = sbr.rel (0) target = $region17
    $region16: #{tpu_custom_call.1} parent=1 // pred_region
      %42 = dma.done [#allocation6], 32768
    $region17: #{tpu_custom_call.1} parent=1 // pred_fallthru
      _
    %v43 = vld [vmem:[#allocation2] sm:$0xff]
    %v44 = vld [vmem:[#allocation2 + $0x8] sm:$0xff]
    %v45 = vld [vmem:[#allocation2 + $0x10] sm:$0xff]
    %v46 = vld [vmem:[#allocation2 + $0x18] sm:$0xff]
    %v47 = vld [vmem:[#allocation2 + $0x20] sm:$0xff]
    %v48 = vld [vmem:[#allocation2 + $0x28] sm:$0xff]
    %v49 = vld [vmem:[#allocation2 + $0x30] sm:$0xff]
    %v50 = vld [vmem:[#allocation2 + $0x38] sm:$0xff]
    %v51 = vld [vmem:[#allocation2 + $0x40] sm:$0xff]
    %v52 = vld [vmem:[#allocation2 + $0x48] sm:$0xff]
    %v53 = vld [vmem:[#allocation2 + $0x50] sm:$0xff]
    %v54 = vld [vmem:[#allocation2 + $0x58] sm:$0xff]
    %v55 = vld [vmem:[#allocation2 + $0x60] sm:$0xff]
    %v56 = vld [vmem:[#allocation2 + $0x68] sm:$0xff]
    %v57 = vld [vmem:[#allocation2 + $0x70] sm:$0xff]
    %v58 = vld [vmem:[#allocation2 + $0x78] sm:$0xff]
    %v59 = vld [vmem:[#allocation5] sm:$0xff]
    %v60 = vld [vmem:[#allocation5 + $0x8] sm:$0xff]
    %v61 = vld [vmem:[#allocation5 + $0x10] sm:$0xff]
    %v62 = vld [vmem:[#allocation5 + $0x18] sm:$0xff]
    %v63 = vld [vmem:[#allocation5 + $0x20] sm:$0xff]
    %v64 = vld [vmem:[#allocation5 + $0x28] sm:$0xff]
    %v65 = vld [vmem:[#allocation5 + $0x30] sm:$0xff]
    %v66 = vld [vmem:[#allocation5 + $0x38] sm:$0xff]
    %v67 = vld [vmem:[#allocation5 + $0x40] sm:$0xff]
    %v68 = vld [vmem:[#allocation5 + $0x48] sm:$0xff]
    %v69 = vld [vmem:[#allocation5 + $0x50] sm:$0xff]
    %v70 = vld [vmem:[#allocation5 + $0x58] sm:$0xff]
    %v71 = vld [vmem:[#allocation5 + $0x60] sm:$0xff]
    %v72 = vld [vmem:[#allocation5 + $0x68] sm:$0xff]
    %v73 = vld [vmem:[#allocation5 + $0x70] sm:$0xff]
    %v74 = vld [vmem:[#allocation5 + $0x78] sm:$0xff]
    %v75 = vld [vmem:[#allocation5 + $0x80] sm:$0xff]
    %v76 = vld [vmem:[#allocation5 + $0x88] sm:$0xff]
    %v77 = vld [vmem:[#allocation5 + $0x90] sm:$0xff]
    %v78 = vld [vmem:[#allocation5 + $0x98] sm:$0xff]
    %v79 = vld [vmem:[#allocation5 + $0xa0] sm:$0xff]
    %v80 = vld [vmem:[#allocation5 + $0xa8] sm:$0xff]
    %v81 = vld [vmem:[#allocation5 + $0xb0] sm:$0xff]
    %v82 = vld [vmem:[#allocation5 + $0xb8] sm:$0xff]
    %v83 = vld [vmem:[#allocation5 + $0xc0] sm:$0xff]
    %v84 = vld [vmem:[#allocation5 + $0xc8] sm:$0xff]
    %v85 = vld [vmem:[#allocation5 + $0xd0] sm:$0xff]
    %v86 = vld [vmem:[#allocation5 + $0xd8] sm:$0xff]
    %v87 = vld [vmem:[#allocation5 + $0xe0] sm:$0xff]
    %v88 = vld [vmem:[#allocation5 + $0xe8] sm:$0xff]
    %v89 = vld [vmem:[#allocation5 + $0xf0] sm:$0xff]
    %v90 = vld [vmem:[#allocation5 + $0xf8] sm:$0xff]
    %v91 = vld [vmem:[#allocation5 + $0x100] sm:$0xff]
    %v92 = vld [vmem:[#allocation5 + $0x108] sm:$0xff]
    %v93 = vld [vmem:[#allocation5 + $0x110] sm:$0xff]
    %v94 = vld [vmem:[#allocation5 + $0x118] sm:$0xff]
    %v95 = vld [vmem:[#allocation5 + $0x120] sm:$0xff]
    %v96 = vld [vmem:[#allocation5 + $0x128] sm:$0xff]
    %v97 = vld [vmem:[#allocation5 + $0x130] sm:$0xff]
    %v98 = vld [vmem:[#allocation5 + $0x138] sm:$0xff]
    %v99 = vld [vmem:[#allocation5 + $0x140] sm:$0xff]
    %v100 = vld [vmem:[#allocation5 + $0x148] sm:$0xff]
    %v101 = vld [vmem:[#allocation5 + $0x150] sm:$0xff]
    %v102 = vld [vmem:[#allocation5 + $0x158] sm:$0xff]
    %v103 = vld [vmem:[#allocation5 + $0x160] sm:$0xff]
    %v104 = vld [vmem:[#allocation5 + $0x168] sm:$0xff]
    %v105 = vld [vmem:[#allocation5 + $0x170] sm:$0xff]
    %v106 = vld [vmem:[#allocation5 + $0x178] sm:$0xff]
    %v107 = vld [vmem:[#allocation5 + $0x180] sm:$0xff]
    %v108 = vld [vmem:[#allocation5 + $0x188] sm:$0xff]
    %v109 = vld [vmem:[#allocation5 + $0x190] sm:$0xff]
    %v110 = vld [vmem:[#allocation5 + $0x198] sm:$0xff]
    %v111 = vld [vmem:[#allocation5 + $0x1a0] sm:$0xff]
    %v112 = vld [vmem:[#allocation5 + $0x1a8] sm:$0xff]
    %v113 = vld [vmem:[#allocation5 + $0x1b0] sm:$0xff]
    %v114 = vld [vmem:[#allocation5 + $0x1b8] sm:$0xff]
    %v115 = vld [vmem:[#allocation5 + $0x1c0] sm:$0xff]
    %v116 = vld [vmem:[#allocation5 + $0x1c8] sm:$0xff]
    %v117 = vld [vmem:[#allocation5 + $0x1d0] sm:$0xff]
    %v118 = vld [vmem:[#allocation5 + $0x1d8] sm:$0xff]
    %v119 = vld [vmem:[#allocation5 + $0x1e0] sm:$0xff]
    %v120 = vld [vmem:[#allocation5 + $0x1e8] sm:$0xff]
    %v121 = vld [vmem:[#allocation5 + $0x1f0] sm:$0xff]
    %v122 = vld [vmem:[#allocation5 + $0x1f8] sm:$0xff]
    %v123 = vld [vmem:[#allocation5 + $0x200] sm:$0xff]
    %v124 = vld [vmem:[#allocation5 + $0x208] sm:$0xff]
    %v125 = vld [vmem:[#allocation5 + $0x210] sm:$0xff]
    %v126 = vld [vmem:[#allocation5 + $0x218] sm:$0xff]
    %v127 = vld [vmem:[#allocation5 + $0x220] sm:$0xff]
    %v128 = vld [vmem:[#allocation5 + $0x228] sm:$0xff]
    %v129 = vld [vmem:[#allocation5 + $0x230] sm:$0xff]
    %v130 = vld [vmem:[#allocation5 + $0x238] sm:$0xff]
    %v131 = vld [vmem:[#allocation5 + $0x240] sm:$0xff]
    %v132 = vld [vmem:[#allocation5 + $0x248] sm:$0xff]
    %v133 = vld [vmem:[#allocation5 + $0x250] sm:$0xff]
    %v134 = vld [vmem:[#allocation5 + $0x258] sm:$0xff]
    %v135 = vld [vmem:[#allocation5 + $0x260] sm:$0xff]
    %v136 = vld [vmem:[#allocation5 + $0x268] sm:$0xff]
    %v137 = vld [vmem:[#allocation5 + $0x270] sm:$0xff]
    %v138 = vld [vmem:[#allocation5 + $0x278] sm:$0xff]
    %v139 = vld [vmem:[#allocation5 + $0x280] sm:$0xff]
    %v140 = vld [vmem:[#allocation5 + $0x288] sm:$0xff]
    %v141 = vld [vmem:[#allocation5 + $0x290] sm:$0xff]
    %v142 = vld [vmem:[#allocation5 + $0x298] sm:$0xff]
    %v143 = vld [vmem:[#allocation5 + $0x2a0] sm:$0xff]
    %v144 = vld [vmem:[#allocation5 + $0x2a8] sm:$0xff]
    %v145 = vld [vmem:[#allocation5 + $0x2b0] sm:$0xff]
    %v146 = vld [vmem:[#allocation5 + $0x2b8] sm:$0xff]
    %v147 = vld [vmem:[#allocation5 + $0x2c0] sm:$0xff]
    %v148 = vld [vmem:[#allocation5 + $0x2c8] sm:$0xff]
    %v149 = vld [vmem:[#allocation5 + $0x2d0] sm:$0xff]
    %v150 = vld [vmem:[#allocation5 + $0x2d8] sm:$0xff]
    %v151 = vld [vmem:[#allocation5 + $0x2e0] sm:$0xff]
    %v152 = vld [vmem:[#allocation5 + $0x2e8] sm:$0xff]
    %v153 = vld [vmem:[#allocation5 + $0x2f0] sm:$0xff]
    %v154 = vld [vmem:[#allocation5 + $0x2f8] sm:$0xff]
    %v155 = vld [vmem:[#allocation5 + $0x300] sm:$0xff]
    %v156 = vld [vmem:[#allocation5 + $0x308] sm:$0xff]
    %v157 = vld [vmem:[#allocation5 + $0x310] sm:$0xff]
    %v158 = vld [vmem:[#allocation5 + $0x318] sm:$0xff]
    %v159 = vld [vmem:[#allocation5 + $0x320] sm:$0xff]
    %v160 = vld [vmem:[#allocation5 + $0x328] sm:$0xff]
    %v161 = vld [vmem:[#allocation5 + $0x330] sm:$0xff]
    %v162 = vld [vmem:[#allocation5 + $0x338] sm:$0xff]
    %v163 = vld [vmem:[#allocation5 + $0x340] sm:$0xff]
    %v164 = vld [vmem:[#allocation5 + $0x348] sm:$0xff]
    %v165 = vld [vmem:[#allocation5 + $0x350] sm:$0xff]
    %v166 = vld [vmem:[#allocation5 + $0x358] sm:$0xff]
    %v167 = vld [vmem:[#allocation5 + $0x360] sm:$0xff]
    %v168 = vld [vmem:[#allocation5 + $0x368] sm:$0xff]
    %v169 = vld [vmem:[#allocation5 + $0x370] sm:$0xff]
    %v170 = vld [vmem:[#allocation5 + $0x378] sm:$0xff]
    %v171 = vld [vmem:[#allocation5 + $0x380] sm:$0xff]
    %v172 = vld [vmem:[#allocation5 + $0x388] sm:$0xff]
    %v173 = vld [vmem:[#allocation5 + $0x390] sm:$0xff]
    %v174 = vld [vmem:[#allocation5 + $0x398] sm:$0xff]
    %v175 = vld [vmem:[#allocation5 + $0x3a0] sm:$0xff]
    %v176 = vld [vmem:[#allocation5 + $0x3a8] sm:$0xff]
    %v177 = vld [vmem:[#allocation5 + $0x3b0] sm:$0xff]
    %v178 = vld [vmem:[#allocation5 + $0x3b8] sm:$0xff]
    %v179 = vld [vmem:[#allocation5 + $0x3c0] sm:$0xff]
    %v180 = vld [vmem:[#allocation5 + $0x3c8] sm:$0xff]
    %v181 = vld [vmem:[#allocation5 + $0x3d0] sm:$0xff]
    %v182 = vld [vmem:[#allocation5 + $0x3d8] sm:$0xff]
    %v183 = vld [vmem:[#allocation5 + $0x3e0] sm:$0xff]
    %v184 = vld [vmem:[#allocation5 + $0x3e8] sm:$0xff]
    %v185 = vld [vmem:[#allocation5 + $0x3f0] sm:$0xff]
    %v186 = vld [vmem:[#allocation5 + $0x3f8] sm:$0xff]
    %v187 = vld [vmem:[#allocation5 + $0x400] sm:$0xff]
    %v188 = vld [vmem:[#allocation5 + $0x408] sm:$0xff]
    %v189 = vld [vmem:[#allocation5 + $0x410] sm:$0xff]
    %v190 = vld [vmem:[#allocation5 + $0x418] sm:$0xff]
    %v191 = vld [vmem:[#allocation5 + $0x420] sm:$0xff]
    %v192 = vld [vmem:[#allocation5 + $0x428] sm:$0xff]
    %v193 = vld [vmem:[#allocation5 + $0x430] sm:$0xff]
    %v194 = vld [vmem:[#allocation5 + $0x438] sm:$0xff]
    %v195 = vld [vmem:[#allocation5 + $0x440] sm:$0xff]
    %v196 = vld [vmem:[#allocation5 + $0x448] sm:$0xff]
    %v197 = vld [vmem:[#allocation5 + $0x450] sm:$0xff]
    %v198 = vld [vmem:[#allocation5 + $0x458] sm:$0xff]
    %v199 = vld [vmem:[#allocation5 + $0x460] sm:$0xff]
    %v200 = vld [vmem:[#allocation5 + $0x468] sm:$0xff]
    %v201 = vld [vmem:[#allocation5 + $0x470] sm:$0xff]
    %v202 = vld [vmem:[#allocation5 + $0x478] sm:$0xff]
    %v203 = vld [vmem:[#allocation5 + $0x480] sm:$0xff]
    %v204 = vld [vmem:[#allocation5 + $0x488] sm:$0xff]
    %v205 = vld [vmem:[#allocation5 + $0x490] sm:$0xff]
    %v206 = vld [vmem:[#allocation5 + $0x498] sm:$0xff]
    %v207 = vld [vmem:[#allocation5 + $0x4a0] sm:$0xff]
    %v208 = vld [vmem:[#allocation5 + $0x4a8] sm:$0xff]
    %v209 = vld [vmem:[#allocation5 + $0x4b0] sm:$0xff]
    %v210 = vld [vmem:[#allocation5 + $0x4b8] sm:$0xff]
    %v211 = vld [vmem:[#allocation5 + $0x4c0] sm:$0xff]
    %v212 = vld [vmem:[#allocation5 + $0x4c8] sm:$0xff]
    %v213 = vld [vmem:[#allocation5 + $0x4d0] sm:$0xff]
    %v214 = vld [vmem:[#allocation5 + $0x4d8] sm:$0xff]
    %v215 = vld [vmem:[#allocation5 + $0x4e0] sm:$0xff]
    %v216 = vld [vmem:[#allocation5 + $0x4e8] sm:$0xff]
    %v217 = vld [vmem:[#allocation5 + $0x4f0] sm:$0xff]
    %v218 = vld [vmem:[#allocation5 + $0x4f8] sm:$0xff]
    %v219 = vld [vmem:[#allocation5 + $0x500] sm:$0xff]
    %v220 = vld [vmem:[#allocation5 + $0x508] sm:$0xff]
    %v221 = vld [vmem:[#allocation5 + $0x510] sm:$0xff]
    %v222 = vld [vmem:[#allocation5 + $0x518] sm:$0xff]
    %v223 = vld [vmem:[#allocation5 + $0x520] sm:$0xff]
    %v224 = vld [vmem:[#allocation5 + $0x528] sm:$0xff]
    %v225 = vld [vmem:[#allocation5 + $0x530] sm:$0xff]
    %v226 = vld [vmem:[#allocation5 + $0x538] sm:$0xff]
    %v227 = vld [vmem:[#allocation5 + $0x540] sm:$0xff]
    %v228 = vld [vmem:[#allocation5 + $0x548] sm:$0xff]
    %v229 = vld [vmem:[#allocation5 + $0x550] sm:$0xff]
    %v230 = vld [vmem:[#allocation5 + $0x558] sm:$0xff]
    %v231 = vld [vmem:[#allocation5 + $0x560] sm:$0xff]
    %v232 = vld [vmem:[#allocation5 + $0x568] sm:$0xff]
    %v233 = vld [vmem:[#allocation5 + $0x570] sm:$0xff]
    %v234 = vld [vmem:[#allocation5 + $0x578] sm:$0xff]
    %v235 = vld [vmem:[#allocation5 + $0x580] sm:$0xff]
    %v236 = vld [vmem:[#allocation5 + $0x588] sm:$0xff]
    %v237 = vld [vmem:[#allocation5 + $0x590] sm:$0xff]
    %v238 = vld [vmem:[#allocation5 + $0x598] sm:$0xff]
    %v239 = vld [vmem:[#allocation5 + $0x5a0] sm:$0xff]
    %v240 = vld [vmem:[#allocation5 + $0x5a8] sm:$0xff]
    %v241 = vld [vmem:[#allocation5 + $0x5b0] sm:$0xff]
    %v242 = vld [vmem:[#allocation5 + $0x5b8] sm:$0xff]
    %v243 = vld [vmem:[#allocation5 + $0x5c0] sm:$0xff]
    %v244 = vld [vmem:[#allocation5 + $0x5c8] sm:$0xff]
    %v245 = vld [vmem:[#allocation5 + $0x5d0] sm:$0xff]
    %v246 = vld [vmem:[#allocation5 + $0x5d8] sm:$0xff]
    %v247 = vld [vmem:[#allocation5 + $0x5e0] sm:$0xff]
    %v248 = vld [vmem:[#allocation5 + $0x5e8] sm:$0xff]
    %v249 = vld [vmem:[#allocation5 + $0x5f0] sm:$0xff]
    %v250 = vld [vmem:[#allocation5 + $0x5f8] sm:$0xff]
    %v251 = vld [vmem:[#allocation5 + $0x600] sm:$0xff]
    %v252 = vld [vmem:[#allocation5 + $0x608] sm:$0xff]
    %v253 = vld [vmem:[#allocation5 + $0x610] sm:$0xff]
    %v254 = vld [vmem:[#allocation5 + $0x618] sm:$0xff]
    %v255 = vld [vmem:[#allocation5 + $0x620] sm:$0xff]
    %v256 = vld [vmem:[#allocation5 + $0x628] sm:$0xff]
    %v257 = vld [vmem:[#allocation5 + $0x630] sm:$0xff]
    %v258 = vld [vmem:[#allocation5 + $0x638] sm:$0xff]
    %v259 = vld [vmem:[#allocation5 + $0x640] sm:$0xff]
    %v260 = vld [vmem:[#allocation5 + $0x648] sm:$0xff]
    %v261 = vld [vmem:[#allocation5 + $0x650] sm:$0xff]
    %v262 = vld [vmem:[#allocation5 + $0x658] sm:$0xff]
    %v263 = vld [vmem:[#allocation5 + $0x660] sm:$0xff]
    %v264 = vld [vmem:[#allocation5 + $0x668] sm:$0xff]
    %v265 = vld [vmem:[#allocation5 + $0x670] sm:$0xff]
    %v266 = vld [vmem:[#allocation5 + $0x678] sm:$0xff]
    %v267 = vld [vmem:[#allocation5 + $0x680] sm:$0xff]
    %v268 = vld [vmem:[#allocation5 + $0x688] sm:$0xff]
    %v269 = vld [vmem:[#allocation5 + $0x690] sm:$0xff]
    %v270 = vld [vmem:[#allocation5 + $0x698] sm:$0xff]
    %v271 = vld [vmem:[#allocation5 + $0x6a0] sm:$0xff]
    %v272 = vld [vmem:[#allocation5 + $0x6a8] sm:$0xff]
    %v273 = vld [vmem:[#allocation5 + $0x6b0] sm:$0xff]
    %v274 = vld [vmem:[#allocation5 + $0x6b8] sm:$0xff]
    %v275 = vld [vmem:[#allocation5 + $0x6c0] sm:$0xff]
    %v276 = vld [vmem:[#allocation5 + $0x6c8] sm:$0xff]
    %v277 = vld [vmem:[#allocation5 + $0x6d0] sm:$0xff]
    %v278 = vld [vmem:[#allocation5 + $0x6d8] sm:$0xff]
    %v279 = vld [vmem:[#allocation5 + $0x6e0] sm:$0xff]
    %v280 = vld [vmem:[#allocation5 + $0x6e8] sm:$0xff]
    %v281 = vld [vmem:[#allocation5 + $0x6f0] sm:$0xff]
    %v282 = vld [vmem:[#allocation5 + $0x6f8] sm:$0xff]
    %v283 = vld [vmem:[#allocation5 + $0x700] sm:$0xff]
    %v284 = vld [vmem:[#allocation5 + $0x708] sm:$0xff]
    %v285 = vld [vmem:[#allocation5 + $0x710] sm:$0xff]
    %v286 = vld [vmem:[#allocation5 + $0x718] sm:$0xff]
    %v287 = vld [vmem:[#allocation5 + $0x720] sm:$0xff]
    %v288 = vld [vmem:[#allocation5 + $0x728] sm:$0xff]
    %v289 = vld [vmem:[#allocation5 + $0x730] sm:$0xff]
    %v290 = vld [vmem:[#allocation5 + $0x738] sm:$0xff]
    %v291 = vld [vmem:[#allocation5 + $0x740] sm:$0xff]
    %v292 = vld [vmem:[#allocation5 + $0x748] sm:$0xff]
    %v293 = vld [vmem:[#allocation5 + $0x750] sm:$0xff]
    %v294 = vld [vmem:[#allocation5 + $0x758] sm:$0xff]
    %v295 = vld [vmem:[#allocation5 + $0x760] sm:$0xff]
    %v296 = vld [vmem:[#allocation5 + $0x768] sm:$0xff]
    %v297 = vld [vmem:[#allocation5 + $0x770] sm:$0xff]
    %v298 = vld [vmem:[#allocation5 + $0x778] sm:$0xff]
    %v299 = vld [vmem:[#allocation5 + $0x780] sm:$0xff]
    %v300 = vld [vmem:[#allocation5 + $0x788] sm:$0xff]
    %v301 = vld [vmem:[#allocation5 + $0x790] sm:$0xff]
    %v302 = vld [vmem:[#allocation5 + $0x798] sm:$0xff]
    %v303 = vld [vmem:[#allocation5 + $0x7a0] sm:$0xff]
    %v304 = vld [vmem:[#allocation5 + $0x7a8] sm:$0xff]
    %v305 = vld [vmem:[#allocation5 + $0x7b0] sm:$0xff]
    %v306 = vld [vmem:[#allocation5 + $0x7b8] sm:$0xff]
    %v307 = vld [vmem:[#allocation5 + $0x7c0] sm:$0xff]
    %v308 = vld [vmem:[#allocation5 + $0x7c8] sm:$0xff]
    %v309 = vld [vmem:[#allocation5 + $0x7d0] sm:$0xff]
    %v310 = vld [vmem:[#allocation5 + $0x7d8] sm:$0xff]
    %v311 = vld [vmem:[#allocation5 + $0x7e0] sm:$0xff]
    %v312 = vld [vmem:[#allocation5 + $0x7e8] sm:$0xff]
    %v313 = vld [vmem:[#allocation5 + $0x7f0] sm:$0xff]
    %v314 = vld [vmem:[#allocation5 + $0x7f8] sm:$0xff]
    %315 = vmatprep.subr.mxu0 %v60
    %316 = vmatpush1.msra.mxu0 %v59
    %317 = vmatprep.subr.mxu0 %v64
    %318 = vmatpush1.msra.mxu0 %v63
    %319 = vmatprep.subr.mxu0 %v68
    %320 = vmatpush1.msra.mxu0 %v67
    %321 = vmatprep.subr.mxu0 %v72
    %322 = vmatpush1.msra.mxu0 %v71
    %323 = vmatprep.subr.mxu0 %v76
    %324 = vmatpush1.msra.mxu0 %v75
    %325 = vmatprep.subr.mxu0 %v80
    %326 = vmatpush1.msra.mxu0 %v79
    %327 = vmatprep.subr.mxu0 %v84
    %328 = vmatpush1.msra.mxu0 %v83
    %329 = vmatprep.subr.mxu0 %v88
    %330 = vmatpush1.msra.mxu0 %v87
    %331 = vmatprep.subr.mxu0 %v92
    %332 = vmatpush1.msra.mxu0 %v91
    %333 = vmatprep.subr.mxu0 %v96
    %334 = vmatpush1.msra.mxu0 %v95
    %335 = vmatprep.subr.mxu0 %v100
    %336 = vmatpush1.msra.mxu0 %v99
    %337 = vmatprep.subr.mxu0 %v104
    %338 = vmatpush1.msra.mxu0 %v103
    %339 = vmatprep.subr.mxu0 %v108
    %340 = vmatpush1.msra.mxu0 %v107
    %341 = vmatprep.subr.mxu0 %v112
    %342 = vmatpush1.msra.mxu0 %v111
    %343 = vmatprep.subr.mxu0 %v116
    %344 = vmatpush1.msra.mxu0 %v115
    %345 = vmatprep.subr.mxu0 %v120
    %346 = vmatpush1.msra.mxu0 %v119
    %347 = vmatprep.subr.mxu0 %v124
    %348 = vmatpush1.msra.mxu0 %v123
    %349 = vmatprep.subr.mxu0 %v128
    %350 = vmatpush1.msra.mxu0 %v127
    %351 = vmatprep.subr.mxu0 %v132
    %352 = vmatpush1.msra.mxu0 %v131
    %353 = vmatprep.subr.mxu0 %v136
    %354 = vmatpush1.msra.mxu0 %v135
    %355 = vmatprep.subr.mxu0 %v140
    %356 = vmatpush1.msra.mxu0 %v139
    %357 = vmatprep.subr.mxu0 %v144
    %358 = vmatpush1.msra.mxu0 %v143
    %359 = vmatprep.subr.mxu0 %v148
    %360 = vmatpush1.msra.mxu0 %v147
    %361 = vmatprep.subr.mxu0 %v152
    %362 = vmatpush1.msra.mxu0 %v151
    %363 = vmatprep.subr.mxu0 %v156
    %364 = vmatpush1.msra.mxu0 %v155
    %365 = vmatprep.subr.mxu0 %v160
    %366 = vmatpush1.msra.mxu0 %v159
    %367 = vmatprep.subr.mxu0 %v164
    %368 = vmatpush1.msra.mxu0 %v163
    %369 = vmatprep.subr.mxu0 %v168
    %370 = vmatpush1.msra.mxu0 %v167
    %371 = vmatprep.subr.mxu0 %v172
    %372 = vmatpush1.msra.mxu0 %v171
    %373 = vmatprep.subr.mxu0 %v176
    %374 = vmatpush1.msra.mxu0 %v175
    %375 = vmatprep.subr.mxu0 %v180
    %376 = vmatpush1.msra.mxu0 %v179
    %377 = vmatprep.subr.mxu0 %v184
    %378 = vmatpush1.msra.mxu0 %v183
    %379 = vmatprep.mubr.f32.mxu0 %v44
    %380 = vmatmul.mubr.f32.gmra.mrb[0].mxu0 %v43
    %v381 = vpop.f32.mrb[0].mxu0
    %v382 = vadd.f32 0.0, %v381
    %v383 = vpop.f32.mrb[0].mxu0
    %v384 = vadd.f32 0.0, %v383
    %385 = vmatprep.mubr.f32.mxu0 %v48
    %386 = vmatmul.mubr.f32.gmra.mrb[0].mxu0 %v47
    %v387 = vpop.f32.mrb[0].mxu0
    %v388 = vadd.f32 0.0, %v387
    %v389 = vpop.f32.mrb[0].mxu0
    %v390 = vadd.f32 0.0, %v389
    %391 = vmatprep.mubr.f32.mxu0 %v52
    %392 = vmatmul.mubr.f32.gmra.mrb[0].mxu0 %v51
    %v393 = vpop.f32.mrb[0].mxu0
    %v394 = vadd.f32 0.0, %v393
    %v395 = vpop.f32.mrb[0].mxu0
    %v396 = vadd.f32 0.0, %v395
    %397 = vmatprep.mubr.f32.mxu0 %v56
    %398 = vmatmul.mubr.f32.gmra.mrb[0].mxu0 %v55
    %v399 = vpop.f32.mrb[0].mxu0
    %v400 = vadd.f32 0.0, %v399
    %v401 = vpop.f32.mrb[0].mxu0
    %v402 = vadd.f32 0.0, %v401
    %403 = vdwg.mxu0
    %404 = vmatprep.subr.mxu0 %v188
    %405 = vmatpush1.msra.mxu0 %v187
    %406 = vmatprep.subr.mxu0 %v192
    %407 = vmatpush1.msra.mxu0 %v191
    %408 = vmatprep.subr.mxu0 %v196
    %409 = vmatpush1.msra.mxu0 %v195
    %410 = vmatprep.subr.mxu0 %v200
    %411 = vmatpush1.msra.mxu0 %v199
    %412 = vmatprep.subr.mxu0 %v204
    %413 = vmatpush1.msra.mxu0 %v203
    %414 = vmatprep.subr.mxu0 %v208
    %415 = vmatpush1.msra.mxu0 %v207
    %416 = vmatprep.subr.mxu0 %v212
    %417 = vmatpush1.msra.mxu0 %v211
    %418 = vmatprep.subr.mxu0 %v216
    %419 = vmatpush1.msra.mxu0 %v215
    %420 = vmatprep.subr.mxu0 %v220
    %421 = vmatpush1.msra.mxu0 %v219
    %422 = vmatprep.subr.mxu0 %v224
    %423 = vmatpush1.msra.mxu0 %v223
    %424 = vmatprep.subr.mxu0 %v228
    %425 = vmatpush1.msra.mxu0 %v227
    %426 = vmatprep.subr.mxu0 %v232
    %427 = vmatpush1.msra.mxu0 %v231
    %428 = vmatprep.subr.mxu0 %v236
    %429 = vmatpush1.msra.mxu0 %v235
    %430 = vmatprep.subr.mxu0 %v240
    %431 = vmatpush1.msra.mxu0 %v239
    %432 = vmatprep.subr.mxu0 %v244
    %433 = vmatpush1.msra.mxu0 %v243
    %434 = vmatprep.subr.mxu0 %v248
    %435 = vmatpush1.msra.mxu0 %v247
    %436 = vmatprep.subr.mxu0 %v252
    %437 = vmatpush1.msra.mxu0 %v251
    %438 = vmatprep.subr.mxu0 %v256
    %439 = vmatpush1.msra.mxu0 %v255
    %440 = vmatprep.subr.mxu0 %v260
    %441 = vmatpush1.msra.mxu0 %v259
    %442 = vmatprep.subr.mxu0 %v264
    %443 = vmatpush1.msra.mxu0 %v263
    %444 = vmatprep.subr.mxu0 %v268
    %445 = vmatpush1.msra.mxu0 %v267
    %446 = vmatprep.subr.mxu0 %v272
    %447 = vmatpush1.msra.mxu0 %v271
    %448 = vmatprep.subr.mxu0 %v276
    %449 = vmatpush1.msra.mxu0 %v275
    %450 = vmatprep.subr.mxu0 %v280
    %451 = vmatpush1.msra.mxu0 %v279
    %452 = vmatprep.subr.mxu0 %v284
    %453 = vmatpush1.msra.mxu0 %v283
    %454 = vmatprep.subr.mxu0 %v288
    %455 = vmatpush1.msra.mxu0 %v287
    %456 = vmatprep.subr.mxu0 %v292
    %457 = vmatpush1.msra.mxu0 %v291
    %458 = vmatprep.subr.mxu0 %v296
    %459 = vmatpush1.msra.mxu0 %v295
    %460 = vmatprep.subr.mxu0 %v300
    %461 = vmatpush1.msra.mxu0 %v299
    %462 = vmatprep.subr.mxu0 %v304
    %463 = vmatpush1.msra.mxu0 %v303
    %464 = vmatprep.subr.mxu0 %v308
    %465 = vmatpush1.msra.mxu0 %v307
    %466 = vmatprep.subr.mxu0 %v312
    %467 = vmatpush1.msra.mxu0 %v311
    %468 = vmatprep.mubr.f32.mxu0 %v46
    %469 = vmatmul.mubr.f32.gmra.mrb[0].mxu0 %v45
    %v470 = vpop.f32.mrb[0].mxu0
    %v471 = vadd.f32 %v382, %v470
    %v472 = vpop.f32.mrb[0].mxu0
    %v473 = vadd.f32 %v384, %v472
    %474 = vmatprep.mubr.f32.mxu0 %v50
    %475 = vmatmul.mubr.f32.gmra.mrb[0].mxu0 %v49
    %v476 = vpop.f32.mrb[0].mxu0
    %v477 = vadd.f32 %v388, %v476
    %v478 = vpop.f32.mrb[0].mxu0
    %v479 = vadd.f32 %v390, %v478
    %480 = vmatprep.mubr.f32.mxu0 %v54
    %481 = vmatmul.mubr.f32.gmra.mrb[0].mxu0 %v53
    %v482 = vpop.f32.mrb[0].mxu0
    %v483 = vadd.f32 %v394, %v482
    %v484 = vpop.f32.mrb[0].mxu0
    %v485 = vadd.f32 %v396, %v484
    %486 = vmatprep.mubr.f32.mxu0 %v58
    %487 = vmatmul.mubr.f32.gmra.mrb[0].mxu0 %v57
    %v488 = vpop.f32.mrb[0].mxu0
    %v489 = vadd.f32 %v400, %v488
    %v490 = vpop.f32.mrb[0].mxu0
    %v491 = vadd.f32 %v402, %v490
    %492 = vdwg.mxu0
    %493 = vmatprep.subr.mxu0 %v62
    %494 = vmatpush1.msra.mxu0 %v61
    %495 = vmatprep.subr.mxu0 %v66
    %496 = vmatpush1.msra.mxu0 %v65
    %497 = vmatprep.subr.mxu0 %v70
    %498 = vmatpush1.msra.mxu0 %v69
    %499 = vmatprep.subr.mxu0 %v74
    %500 = vmatpush1.msra.mxu0 %v73
    %501 = vmatprep.subr.mxu0 %v78
    %502 = vmatpush1.msra.mxu0 %v77
    %503 = vmatprep.subr.mxu0 %v82
    %504 = vmatpush1.msra.mxu0 %v81
    %505 = vmatprep.subr.mxu0 %v86
    %506 = vmatpush1.msra.mxu0 %v85
    %507 = vmatprep.subr.mxu0 %v90
    %508 = vmatpush1.msra.mxu0 %v89
    %509 = vmatprep.subr.mxu0 %v94
    %510 = vmatpush1.msra.mxu0 %v93
    %511 = vmatprep.subr.mxu0 %v98
    %512 = vmatpush1.msra.mxu0 %v97
    %513 = vmatprep.subr.mxu0 %v102
    %514 = vmatpush1.msra.mxu0 %v101
    %515 = vmatprep.subr.mxu0 %v106
    %516 = vmatpush1.msra.mxu0 %v105
    %517 = vmatprep.subr.mxu0 %v110
    %518 = vmatpush1.msra.mxu0 %v109
    %519 = vmatprep.subr.mxu0 %v114
    %520 = vmatpush1.msra.mxu0 %v113
    %521 = vmatprep.subr.mxu0 %v118
    %522 = vmatpush1.msra.mxu0 %v117
    %523 = vmatprep.subr.mxu0 %v122
    %524 = vmatpush1.msra.mxu0 %v121
    %525 = vmatprep.subr.mxu0 %v126
    %526 = vmatpush1.msra.mxu0 %v125
    %527 = vmatprep.subr.mxu0 %v130
    %528 = vmatpush1.msra.mxu0 %v129
    %529 = vmatprep.subr.mxu0 %v134
    %530 = vmatpush1.msra.mxu0 %v133
    %531 = vmatprep.subr.mxu0 %v138
    %532 = vmatpush1.msra.mxu0 %v137
    %533 = vmatprep.subr.mxu0 %v142
    %534 = vmatpush1.msra.mxu0 %v141
    %535 = vmatprep.subr.mxu0 %v146
    %536 = vmatpush1.msra.mxu0 %v145
    %537 = vmatprep.subr.mxu0 %v150
    %538 = vmatpush1.msra.mxu0 %v149
    %539 = vmatprep.subr.mxu0 %v154
    %540 = vmatpush1.msra.mxu0 %v153
    %541 = vmatprep.subr.mxu0 %v158
    %542 = vmatpush1.msra.mxu0 %v157
    %543 = vmatprep.subr.mxu0 %v162
    %544 = vmatpush1.msra.mxu0 %v161
    %545 = vmatprep.subr.mxu0 %v166
    %546 = vmatpush1.msra.mxu0 %v165
    %547 = vmatprep.subr.mxu0 %v170
    %548 = vmatpush1.msra.mxu0 %v169
    %549 = vmatprep.subr.mxu0 %v174
    %550 = vmatpush1.msra.mxu0 %v173
    %551 = vmatprep.subr.mxu0 %v178
    %552 = vmatpush1.msra.mxu0 %v177
    %553 = vmatprep.subr.mxu0 %v182
    %554 = vmatpush1.msra.mxu0 %v181
    %555 = vmatprep.subr.mxu0 %v186
    %556 = vmatpush1.msra.mxu0 %v185
    %557 = vmatprep.mubr.f32.mxu0 %v44
    %558 = vmatmul.mubr.f32.gmra.mrb[0].mxu0 %v43
    %v559 = vpop.f32.mrb[0].mxu0
    %v560 = vadd.f32 0.0, %v559
    %v561 = vpop.f32.mrb[0].mxu0
    %v562 = vadd.f32 0.0, %v561
    %563 = vmatprep.mubr.f32.mxu0 %v48
    %564 = vmatmul.mubr.f32.gmra.mrb[0].mxu0 %v47
    %v565 = vpop.f32.mrb[0].mxu0
    %v566 = vadd.f32 0.0, %v565
    %v567 = vpop.f32.mrb[0].mxu0
    %v568 = vadd.f32 0.0, %v567
    %569 = vmatprep.mubr.f32.mxu0 %v52
    %570 = vmatmul.mubr.f32.gmra.mrb[0].mxu0 %v51
    %v571 = vpop.f32.mrb[0].mxu0
    %v572 = vadd.f32 0.0, %v571
    %v573 = vpop.f32.mrb[0].mxu0
    %v574 = vadd.f32 0.0, %v573
    %575 = vmatprep.mubr.f32.mxu0 %v56
    %576 = vmatmul.mubr.f32.gmra.mrb[0].mxu0 %v55
    %v577 = vpop.f32.mrb[0].mxu0
    %v578 = vadd.f32 0.0, %v577
    %v579 = vpop.f32.mrb[0].mxu0
    %v580 = vadd.f32 0.0, %v579
    %581 = vdwg.mxu0
    %582 = vmatprep.subr.mxu0 %v190
    %583 = vmatpush1.msra.mxu0 %v189
    %584 = vmatprep.subr.mxu0 %v194
    %585 = vmatpush1.msra.mxu0 %v193
    %586 = vmatprep.subr.mxu0 %v198
    %587 = vmatpush1.msra.mxu0 %v197
    %588 = vmatprep.subr.mxu0 %v202
    %589 = vmatpush1.msra.mxu0 %v201
    %590 = vmatprep.subr.mxu0 %v206
    %591 = vmatpush1.msra.mxu0 %v205
    %592 = vmatprep.subr.mxu0 %v210
    %593 = vmatpush1.msra.mxu0 %v209
    %594 = vmatprep.subr.mxu0 %v214
    %595 = vmatpush1.msra.mxu0 %v213
    %596 = vmatprep.subr.mxu0 %v218
    %597 = vmatpush1.msra.mxu0 %v217
    %598 = vmatprep.subr.mxu0 %v222
    %599 = vmatpush1.msra.mxu0 %v221
    %600 = vmatprep.subr.mxu0 %v226
    %601 = vmatpush1.msra.mxu0 %v225
    %602 = vmatprep.subr.mxu0 %v230
    %603 = vmatpush1.msra.mxu0 %v229
    %604 = vmatprep.subr.mxu0 %v234
    %605 = vmatpush1.msra.mxu0 %v233
    %606 = vmatprep.subr.mxu0 %v238
    %607 = vmatpush1.msra.mxu0 %v237
    %608 = vmatprep.subr.mxu0 %v242
    %609 = vmatpush1.msra.mxu0 %v241
    %610 = vmatprep.subr.mxu0 %v246
    %611 = vmatpush1.msra.mxu0 %v245
    %612 = vmatprep.subr.mxu0 %v250
    %613 = vmatpush1.msra.mxu0 %v249
    %614 = vmatprep.subr.mxu0 %v254
    %615 = vmatpush1.msra.mxu0 %v253
    %616 = vmatprep.subr.mxu0 %v258
    %617 = vmatpush1.msra.mxu0 %v257
    %618 = vmatprep.subr.mxu0 %v262
    %619 = vmatpush1.msra.mxu0 %v261
    %620 = vmatprep.subr.mxu0 %v266
    %621 = vmatpush1.msra.mxu0 %v265
    %622 = vmatprep.subr.mxu0 %v270
    %623 = vmatpush1.msra.mxu0 %v269
    %624 = vmatprep.subr.mxu0 %v274
    %625 = vmatpush1.msra.mxu0 %v273
    %626 = vmatprep.subr.mxu0 %v278
    %627 = vmatpush1.msra.mxu0 %v277
    %628 = vmatprep.subr.mxu0 %v282
    %629 = vmatpush1.msra.mxu0 %v281
    %630 = vmatprep.subr.mxu0 %v286
    %631 = vmatpush1.msra.mxu0 %v285
    %632 = vmatprep.subr.mxu0 %v290
    %633 = vmatpush1.msra.mxu0 %v289
    %634 = vmatprep.subr.mxu0 %v294
    %635 = vmatpush1.msra.mxu0 %v293
    %636 = vmatprep.subr.mxu0 %v298
    %637 = vmatpush1.msra.mxu0 %v297
    %638 = vmatprep.subr.mxu0 %v302
    %639 = vmatpush1.msra.mxu0 %v301
    %640 = vmatprep.subr.mxu0 %v306
    %641 = vmatpush1.msra.mxu0 %v305
    %642 = vmatprep.subr.mxu0 %v310
    %643 = vmatpush1.msra.mxu0 %v309
    %644 = vmatprep.subr.mxu0 %v314
    %645 = vmatpush1.msra.mxu0 %v313
    %646 = vmatprep.mubr.f32.mxu0 %v46
    %647 = vmatmul.mubr.f32.gmra.mrb[0].mxu0 %v45
    %v648 = vpop.f32.mrb[0].mxu0
    %v649 = vadd.f32 %v560, %v648
    %v650 = vpop.f32.mrb[0].mxu0
    %v651 = vadd.f32 %v562, %v650
    %652 = vmatprep.mubr.f32.mxu0 %v50
    %653 = vmatmul.mubr.f32.gmra.mrb[0].mxu0 %v49
    %v654 = vpop.f32.mrb[0].mxu0
    %v655 = vadd.f32 %v566, %v654
    %v656 = vpop.f32.mrb[0].mxu0
    %v657 = vadd.f32 %v568, %v656
    %658 = vmatprep.mubr.f32.mxu0 %v54
    %659 = vmatmul.mubr.f32.gmra.mrb[0].mxu0 %v53
    %v660 = vpop.f32.mrb[0].mxu0
    %v661 = vadd.f32 %v572, %v660
    %v662 = vpop.f32.mrb[0].mxu0
    %v663 = vadd.f32 %v574, %v662
    %664 = vmatprep.mubr.f32.mxu0 %v58
    %665 = vmatmul.mubr.f32.gmra.mrb[0].mxu0 %v57
    %v666 = vpop.f32.mrb[0].mxu0
    %v667 = vadd.f32 %v578, %v666
    %v668 = vpop.f32.mrb[0].mxu0
    %v669 = vadd.f32 %v580, %v668
    %670 = vdwg.mxu0
    %671 = vst [vmem:[#allocation7] sm:$0xff] %v471
    %672 = vst [vmem:[#allocation7 + $0x8] sm:$0xff] %v473
    %673 = vst [vmem:[#allocation7 + $0x10] sm:$0xff] %v649
    %674 = vst [vmem:[#allocation7 + $0x18] sm:$0xff] %v651
    %675 = vst [vmem:[#allocation7 + $0x20] sm:$0xff] %v477
    %676 = vst [vmem:[#allocation7 + $0x28] sm:$0xff] %v479
    %677 = vst [vmem:[#allocation7 + $0x30] sm:$0xff] %v655
    %678 = vst [vmem:[#allocation7 + $0x38] sm:$0xff] %v657
    %679 = vst [vmem:[#allocation7 + $0x40] sm:$0xff] %v483
    %680 = vst [vmem:[#allocation7 + $0x48] sm:$0xff] %v485
    %681 = vst [vmem:[#allocation7 + $0x50] sm:$0xff] %v661
    %682 = vst [vmem:[#allocation7 + $0x58] sm:$0xff] %v663
    %683 = vst [vmem:[#allocation7 + $0x60] sm:$0xff] %v489
    %684 = vst [vmem:[#allocation7 + $0x68] sm:$0xff] %v491
    %685 = vst [vmem:[#allocation7 + $0x70] sm:$0xff] %v667
    %686 = vst [vmem:[#allocation7 + $0x78] sm:$0xff] %v669
    %v687 = vmul.f32 %v471, %v471
    %v688 = vmul.f32 %v473, %v473
    %v689 = vmul.f32 %v477, %v477
    %v690 = vmul.f32 %v479, %v479
    %v691 = vmul.f32 %v483, %v483
    %v692 = vmul.f32 %v485, %v485
    %v693 = vmul.f32 %v489, %v489
    %v694 = vmul.f32 %v491, %v491
    %v695 = vmul.f32 %v649, %v649
    %v696 = vmul.f32 %v651, %v651
    %v697 = vmul.f32 %v655, %v655
    %v698 = vmul.f32 %v657, %v657
    %v699 = vmul.f32 %v661, %v661
    %v700 = vmul.f32 %v663, %v663
    %v701 = vmul.f32 %v667, %v667
    %v702 = vmul.f32 %v669, %v669
    %v703 = vadd.f32 %v687, %v695
    %v704 = vadd.f32 %v688, %v696
    %v705 = vadd.f32 %v689, %v697
    %v706 = vadd.f32 %v690, %v698
    %v707 = vadd.f32 %v691, %v699
    %v708 = vadd.f32 %v692, %v700
    %v709 = vadd.f32 %v693, %v701
    %v710 = vadd.f32 %v694, %v702
    %v711 = vrsqrt.pop %v703
    %v712 = vmul.f32 %v703, %v711
    %vm713 = vcmp.eq.f32.partialorder %v703, inf
    %v714 = vsel %vm713, %v703, %v712
    %vm715 = vcmp.eq.f32.partialorder %v703, 0.0
    %v716 = vand.u32 %v703, 2147483648
    %v717 = vsel %vm715, %v716, %v714
    %v718 = vrsqrt.pop %v704
    %v719 = vmul.f32 %v704, %v718
    %vm720 = vcmp.eq.f32.partialorder %v704, inf
    %v721 = vsel %vm720, %v704, %v719
    %vm722 = vcmp.eq.f32.partialorder %v704, 0.0
    %v723 = vand.u32 %v704, 2147483648
    %v724 = vsel %vm722, %v723, %v721
    %v725 = vrsqrt.pop %v705
    %v726 = vmul.f32 %v705, %v725
    %vm727 = vcmp.eq.f32.partialorder %v705, inf
    %v728 = vsel %vm727, %v705, %v726
    %vm729 = vcmp.eq.f32.partialorder %v705, 0.0
    %v730 = vand.u32 %v705, 2147483648
    %v731 = vsel %vm729, %v730, %v728
    %v732 = vrsqrt.pop %v706
    %v733 = vmul.f32 %v706, %v732
    %vm734 = vcmp.eq.f32.partialorder %v706, inf
    %v735 = vsel %vm734, %v706, %v733
    %vm736 = vcmp.eq.f32.partialorder %v706, 0.0
    %v737 = vand.u32 %v706, 2147483648
    %v738 = vsel %vm736, %v737, %v735
    %v739 = vrsqrt.pop %v707
    %v740 = vmul.f32 %v707, %v739
    %vm741 = vcmp.eq.f32.partialorder %v707, inf
    %v742 = vsel %vm741, %v707, %v740
    %vm743 = vcmp.eq.f32.partialorder %v707, 0.0
    %v744 = vand.u32 %v707, 2147483648
    %v745 = vsel %vm743, %v744, %v742
    %v746 = vrsqrt.pop %v708
    %v747 = vmul.f32 %v708, %v746
    %vm748 = vcmp.eq.f32.partialorder %v708, inf
    %v749 = vsel %vm748, %v708, %v747
    %vm750 = vcmp.eq.f32.partialorder %v708, 0.0
    %v751 = vand.u32 %v708, 2147483648
    %v752 = vsel %vm750, %v751, %v749
    %v753 = vrsqrt.pop %v709
    %v754 = vmul.f32 %v709, %v753
    %vm755 = vcmp.eq.f32.partialorder %v709, inf
    %v756 = vsel %vm755, %v709, %v754
    %vm757 = vcmp.eq.f32.partialorder %v709, 0.0
    %v758 = vand.u32 %v709, 2147483648
    %v759 = vsel %vm757, %v758, %v756
    %v760 = vrsqrt.pop %v710
    %v761 = vmul.f32 %v710, %v760
    %vm762 = vcmp.eq.f32.partialorder %v710, inf
    %v763 = vsel %vm762, %v710, %v761
    %vm764 = vcmp.eq.f32.partialorder %v710, 0.0
    %v765 = vand.u32 %v710, 2147483648
    %v766 = vsel %vm764, %v765, %v763
    %767 = vst [vmem:[#allocation8] sm:$0xff] %v717
    %768 = vst [vmem:[#allocation8 + $0x8] sm:$0xff] %v724
    %769 = vst [vmem:[#allocation8 + $0x10] sm:$0xff] %v731
    %770 = vst [vmem:[#allocation8 + $0x18] sm:$0xff] %v738
    %771 = vst [vmem:[#allocation8 + $0x20] sm:$0xff] %v745
    %772 = vst [vmem:[#allocation8 + $0x28] sm:$0xff] %v752
    %773 = vst [vmem:[#allocation8 + $0x30] sm:$0xff] %v759
    %774 = vst [vmem:[#allocation8 + $0x38] sm:$0xff] %v766
    // Predicated region
    $region18: #{tpu_custom_call.1} parent=1 // pred_check
      _
    $region19: #{tpu_custom_call.1} parent=1 // pred_check_branch
      %776 = sbr.rel (0) target = $region21
    $region20: #{tpu_custom_call.1} parent=1 // pred_region
      %s778 = ssub.s32 2048, 2048
      %779 = vsyncadd [#allocation4], %s778
      %s780 = sshll.u32 [#allocation7], 4
      %s781 = int_to_ptr.vmem [resolvable:$true] %s780
      %786 = dma.vmem_to_hbm [thread:$0]  %s781, 2048, %s2, [#allocation4], 512, 512, 32
    $region21: #{tpu_custom_call.1} parent=1 // pred_fallthru
      _
    // Predicated region
    $region22: #{tpu_custom_call.1} parent=1 // pred_check
      _
    $region23: #{tpu_custom_call.1} parent=1 // pred_check_branch
      %788 = sbr.rel (0) target = $region25
    $region24: #{tpu_custom_call.1} parent=1 // pred_region
      %s790 = ssub.s32 1024, 1024
      %791 = vsyncadd [#allocation9], %s790
      %s792 = sshll.u32 [#allocation8], 4
      %s793 = int_to_ptr.vmem [resolvable:$true] %s792
      %798 = dma.vmem_to_hbm [thread:$0]  %s793, 1024, %s3, [#allocation9], 256, 256, 16
    $region25: #{tpu_custom_call.1} parent=1 // pred_fallthru
      _
    // Predicated region
    $region26: #{tpu_custom_call.1} parent=1 // pred_check
      _
    $region27: #{tpu_custom_call.1} parent=1 // pred_check_branch
      %800 = sbr.rel (0) target = $region29
    $region28: #{tpu_custom_call.1} parent=1 // pred_region
      %801 = dma.done [#allocation4], 2048
    $region29: #{tpu_custom_call.1} parent=1 // pred_fallthru
      _
    // Predicated region
    $region30: #{tpu_custom_call.1} parent=1 // pred_check
      _
    $region31: #{tpu_custom_call.1} parent=1 // pred_check_branch
      %803 = sbr.rel (0) target = $region33
    $region32: #{tpu_custom_call.1} parent=1 // pred_region
      %804 = dma.done [#allocation9], 1024
    $region33: #{tpu_custom_call.1} parent=1 // pred_fallthru
      _
    %805 = vsyncpa [#allocation3], 1
    %806 = vsyncpa [#allocation6], 1
    %807 = vsyncpa [#allocation4], 1
    %808 = vsyncpa [#allocation9], 1

</llo_original>
